<compile_context>
chip_gen: v7x
topology: tpu7x:2x2x1
jax: 0.10.0
libtpu: 0.0.40
codegen_flags: <defaults>
</compile_context>

<pallas_src>
import jax
import jax.numpy as jnp
from jax.experimental import pallas as pl
from jax.experimental.pallas import tpu as pltpu


def _invert_forward_kernel(x_ref, w1_ref, b1_ref, w2_ref, b2_ref, a_ref,
                           y_ref, xdec_ref, xdec_acc):
    """Fused forward: 2-layer decoder (computed once) + tiled physics op.

    Grid: 1-D over ny tiles of A.  Per grid step:
      x    : (B, nx)       resident      w1 : (nx, nh)       resident
      b1   : (1, nh)       resident      w2 : (nh, nxdec)    resident
      b2   : (1, nxdec)    resident      a  : (nxdec, TN)    streamed
      y    : (B, TN)       streamed out  xdec : (B, nxdec)   resident out
    """
    j = pl.program_id(0)

    @pl.when(j == 0)
    def _():
        # decoder: Linear -> ReLU -> Linear (tiny; hides under first A DMA)
        x = x_ref[...]
        h = jnp.dot(x, w1_ref[...], preferred_element_type=jnp.float32)
        h = jnp.maximum(h + b1_ref[...], 0.0)
        xdec = jnp.dot(h, w2_ref[...], preferred_element_type=jnp.float32)
        xdec = xdec + b2_ref[...]
        xdec_acc[...] = xdec
        xdec_ref[...] = xdec.astype(xdec_ref.dtype)

    # physics operator on this ny tile: y[:, j*TN:(j+1)*TN] = xdec @ A_tile_j
    xdec = xdec_acc[...].astype(a_ref.dtype)
    y_ref[...] = jnp.dot(
        xdec, a_ref[...], preferred_element_type=jnp.float32
    ).astype(y_ref.dtype)


def _choose_tn(ny, nxdec, a_itemsize, target_tile_bytes=8 << 20):
    """ny tile width: multiple of 128 that divides ny, A tile <= target bytes,
    and (when possible) >= 2 grid steps so the DMA pipeline can overlap."""
    if ny % 128 != 0:
        # TODO(synk): ragged ny -> single full tile; pad ny to a multiple of
        # 128 upstream for lane-dense stores in real configs.
        return ny
    cap = max(128, (ny // 2) // 128 * 128)   # leave >= 2 grid steps
    tn = 128
    t = 256
    while t <= cap:
        if ny % t == 0 and nxdec * t * a_itemsize <= target_tile_bytes:
            tn = t
        t += 128
    return tn


def invert_forward_pallas(x, w1, b1, w2, b2, a, *, tn=None):
    """Pallas forward:  xdec = relu(x@w1 + b1)@w2 + b2 ;  y = xdec @ a."""
    B, nx = x.shape
    nh = w1.shape[1]
    nxdec = w2.shape[1]
    ny = a.shape[1]
    a_itemsize = jnp.dtype(a.dtype).itemsize
    if tn is None:
        tn = _choose_tn(ny, nxdec, a_itemsize)
    assert ny % tn == 0, (ny, tn)
    grid = (ny // tn,)

    const = lambda shape: pl.BlockSpec(shape, lambda j: (0,) * len(shape))

    # VMEM budget: resident decoder params + double-buffered A / y tiles.
    resident = 4 * (B * nx + nx * nh + nh + nh * nxdec + nxdec)
    streamed = 2 * (nxdec * tn * a_itemsize + B * tn * 4)
    outputs = 3 * B * nxdec * 4  # xdec output buffer + scratch
    vmem_limit = int(min(max(2 * resident + streamed + outputs + (8 << 20),
                             32 << 20), 64 << 20))   # <= v7x physical VMEM

    flops = 2 * B * (nx * nh + nh * nxdec + nxdec * ny)
    bytes_accessed = int(x.size * 4 + w1.size * 4 + b1.size * 4 + w2.size * 4
                         + b2.size * 4 + a.size * a_itemsize
                         + B * ny * 4 + B * nxdec * 4)

    y, xdec = pl.pallas_call(
        _invert_forward_kernel,
        out_shape=(
            jax.ShapeDtypeStruct((B, ny), jnp.float32),
            jax.ShapeDtypeStruct((B, nxdec), jnp.float32),
        ),
        grid=grid,
        in_specs=[
            const((B, nx)),
            const((nx, nh)),
            const((1, nh)),
            const((nh, nxdec)),
            const((1, nxdec)),
            pl.BlockSpec((nxdec, tn), lambda j: (0, j)),   # streamed A tiles
        ],
        out_specs=(
            pl.BlockSpec((B, tn), lambda j: (0, j)),       # streamed y tiles
            const((B, nxdec)),                             # resident xdec
        ),
        scratch_shapes=[pltpu.VMEM((B, nxdec), jnp.float32)],
        compiler_params=pltpu.CompilerParams(
            # xdec output + scratch are carried across the ny axis -> arbitrary
            dimension_semantics=("arbitrary",),
            vmem_limit_bytes=vmem_limit,
        ),
        cost_estimate=pl.CostEstimate(
            flops=flops, transcendentals=0, bytes_accessed=bytes_accessed),
    )(x, w1, b1, w2, b2, a)
    return y, xdec


# --- custom VJP so jax.grad through the Pallas forward works ---------------

@jax.custom_vjp
def invert_forward(x, w1, b1, w2, b2, a):
    return invert_forward_pallas(x, w1, b1, w2, b2, a)


def _invert_forward_fwd(x, w1, b1, w2, b2, a):
    y, xdec = invert_forward_pallas(x, w1, b1, w2, b2, a)
    return (y, xdec), (x, w1, b1, w2, a, xdec)


def _invert_forward_bwd(res, cot):
    # Analytic backward in plain JAX (decoder + physics operator).
    x, w1, b1, w2, a, xdec = res
    gy, gxdec = cot
    gy = gy.astype(jnp.float32)
    gxdec = gxdec.astype(jnp.float32)
    a_f32 = a.astype(jnp.float32)

    pre = x @ w1 + b1
    h = jnp.maximum(pre, 0.0)

    d_xdec = gy @ a_f32.T + gxdec
    d_h = (d_xdec @ w2.T) * (pre > 0).astype(jnp.float32)
    d_x = d_h @ w1.T
    d_w1 = x.T @ d_h
    d_b1 = jnp.sum(d_h, axis=0, keepdims=True)
    d_w2 = h.T @ d_xdec
    d_b2 = jnp.sum(d_xdec, axis=0, keepdims=True)
    d_a = (xdec.T @ gy).astype(a.dtype)
    return d_x, d_w1, d_b1, d_w2, d_b2, d_a


invert_forward.defvjp(_invert_forward_fwd, _invert_forward_bwd)


class PallasInvert:
    """JAX/Pallas analogue of TorchInvert: holds the learnable x and op params."""

    def __init__(self, nx, op_params, key, x0=None):
        if x0 is None:
            # torch.rand(...) - 0.5  -> uniform in [-0.5, 0.5)
            self.x = jax.random.uniform(key, (1, nx), dtype=jnp.float32) - 0.5
        else:
            self.x = x0
        self.op_params = op_params
        self.neval = 0

    def forward(self):
        self.neval += 1
        return invert_forward(self.x, *self.op_params)

    def grad(self, loss_fn):
        # gradient w.r.t. the model vector x (analogue of self.x.grad)
        def _loss(x):
            y, xdec = invert_forward(x, *self.op_params)
            return loss_fn(y, xdec)
        return jax.grad(_loss)(self.x)


if __name__ == "__main__":
    # small, lane-friendly sizes; ny = 256 -> 2 grid steps of TN = 128
    nx, nh, nxdec, ny = 32, 128, 256, 256

    key = jax.random.PRNGKey(0)
    k_x, k_w1, k_b1, k_w2, k_b2, k_a = jax.random.split(key, 6)

    # deterministic synthetic operator parameters
    w1 = jax.random.normal(k_w1, (nx, nh), dtype=jnp.float32) / jnp.sqrt(nx)
    b1 = jax.random.normal(k_b1, (1, nh), dtype=jnp.float32) * 0.01
    w2 = jax.random.normal(k_w2, (nh, nxdec), dtype=jnp.float32) / jnp.sqrt(nh)
    b2 = jax.random.normal(k_b2, (1, nxdec), dtype=jnp.float32) * 0.01
    a = jax.random.normal(k_a, (nxdec, ny), dtype=jnp.float32) / jnp.sqrt(nxdec)

    model = PallasInvert(nx, (w1, b1, w2, b2, a), k_x)
    y, xdec = model.forward()
    jax.block_until_ready((y, xdec))

    # reference forward in plain JAX
    h_ref = jnp.maximum(model.x @ w1 + b1, 0.0)
    xdec_ref = h_ref @ w2 + b2
    y_ref = xdec_ref @ a
    assert y.shape == (1, ny) and xdec.shape == (1, nxdec)
    assert jnp.allclose(xdec, xdec_ref, atol=1e-4), "xdec mismatch"
    assert jnp.allclose(y, y_ref, atol=1e-4), "y mismatch"

    # gradient path through the Pallas forward (custom_vjp)
    loss_fn = lambda yy, xd: jnp.sum(yy ** 2) + 0.1 * jnp.sum(xd ** 2)
    g = model.grad(loss_fn)
    g_ref = jax.grad(
        lambda xv: loss_fn(
            (jnp.maximum(xv @ w1 + b1, 0.0) @ w2 + b2) @ a,
            jnp.maximum(xv @ w1 + b1, 0.0) @ w2 + b2))(model.x)
    jax.block_until_ready(g)
    assert g.shape == model.x.shape
    assert jnp.allclose(g, g_ref, rtol=1e-3, atol=1e-3), "grad mismatch"

    # bandwidth-saving option: bf16 physics operator A, f32 MXU accumulation
    y_bf16, xdec_bf16 = invert_forward_pallas(
        model.x, w1, b1, w2, b2, a.astype(jnp.bfloat16))
    jax.block_until_ready((y_bf16, xdec_bf16))
    assert jnp.allclose(y_bf16, y_ref, rtol=5e-2, atol=5e-2), "bf16 y mismatch"

    print("KERNEL_OK")
</pallas_src>

<mosaic_0001>
module attributes {stable_mosaic.version = 11 : i64} {
  func.func @_invert_forward_kernel(%arg0: i32, %arg1: memref<1x32xf32, #tpu.memory_space<vmem>>, %arg2: memref<32x128xf32, #tpu.memory_space<vmem>>, %arg3: memref<1x128xf32, #tpu.memory_space<vmem>>, %arg4: memref<128x256xf32, #tpu.memory_space<vmem>>, %arg5: memref<1x256xf32, #tpu.memory_space<vmem>>, %arg6: memref<256x128xf32, #tpu.memory_space<vmem>>, %arg7: memref<1x128xf32, #tpu.memory_space<vmem>>, %arg8: memref<1x256xf32, #tpu.memory_space<vmem>>, %arg9: memref<1x256xf32, #tpu.memory_space<vmem>>) attributes {dimension_semantics = [#tpu.dimension_semantics<arbitrary>], iteration_bounds = array<i64: 2>, scalar_prefetch = 0 : i64, scratch_operands = 1 : i64, tpu.core_type = #tpu.core_type<tc>, window_params = [{pipeline_mode = #tpu.pipeline_mode<synchronous>, transform_indices = @transform_0, window_bounds = array<i64: 1, 32>}, {pipeline_mode = #tpu.pipeline_mode<synchronous>, transform_indices = @transform_1, window_bounds = array<i64: 32, 128>}, {pipeline_mode = #tpu.pipeline_mode<synchronous>, transform_indices = @transform_2, window_bounds = array<i64: 1, 128>}, {pipeline_mode = #tpu.pipeline_mode<synchronous>, transform_indices = @transform_3, window_bounds = array<i64: 128, 256>}, {pipeline_mode = #tpu.pipeline_mode<synchronous>, transform_indices = @transform_4, window_bounds = array<i64: 1, 256>}, {transform_indices = @transform_5, window_bounds = array<i64: 256, 128>}, {transform_indices = @transform_6, window_bounds = array<i64: 1, 128>}, {pipeline_mode = #tpu.pipeline_mode<synchronous>, transform_indices = @transform_7, window_bounds = array<i64: 1, 256>}]} {
    %c0_i32 = arith.constant 0 : i32
    %0 = arith.cmpi eq, %arg0, %c0_i32 : i32
    %1 = arith.extui %0 : i1 to i32
    %c0_i32_0 = arith.constant 0 : i32
    %2 = arith.cmpi ne, %1, %c0_i32_0 : i32
    scf.if %2 {
      %c0_6 = arith.constant 0 : index
      %c0_7 = arith.constant 0 : index
      %7 = vector.load %arg1[%c0_6, %c0_7] : memref<1x32xf32, #tpu.memory_space<vmem>>, vector<1x32xf32>
      %c0_8 = arith.constant 0 : index
      %c0_9 = arith.constant 0 : index
      %8 = vector.load %arg2[%c0_8, %c0_9] : memref<32x128xf32, #tpu.memory_space<vmem>>, vector<32x128xf32>
      %cst_10 = arith.constant dense<0.000000e+00> : vector<1x128xf32>
      %9 = tpu.matmul %7, %8, %cst_10 {dimension_numbers = #tpu.dot_dimension_numbers<[1], [0], [0], [1], [0, 0, 1, 1], [], []>} : vector<1x32xf32>, vector<32x128xf32>, vector<1x128xf32> -> vector<1x128xf32>
      %c0_11 = arith.constant 0 : index
      %c0_12 = arith.constant 0 : index
      %10 = vector.load %arg3[%c0_11, %c0_12] : memref<1x128xf32, #tpu.memory_space<vmem>>, vector<1x128xf32>
      %11 = arith.addf %9, %10 : vector<1x128xf32>
      %cst_13 = arith.constant 0.000000e+00 : f32
      %12 = vector.broadcast %cst_13 : f32 to vector<1x128xf32>
      %13 = arith.maximumf %11, %12 : vector<1x128xf32>
      %c0_14 = arith.constant 0 : index
      %c0_15 = arith.constant 0 : index
      %14 = vector.load %arg4[%c0_14, %c0_15] : memref<128x256xf32, #tpu.memory_space<vmem>>, vector<128x256xf32>
      %cst_16 = arith.constant dense<0.000000e+00> : vector<1x256xf32>
      %15 = tpu.matmul %13, %14, %cst_16 {dimension_numbers = #tpu.dot_dimension_numbers<[1], [0], [0], [1], [0, 0, 1, 1], [], []>} : vector<1x128xf32>, vector<128x256xf32>, vector<1x256xf32> -> vector<1x256xf32>
      %c0_17 = arith.constant 0 : index
      %c0_18 = arith.constant 0 : index
      %16 = vector.load %arg5[%c0_17, %c0_18] : memref<1x256xf32, #tpu.memory_space<vmem>>, vector<1x256xf32>
      %17 = arith.addf %15, %16 : vector<1x256xf32>
      %c0_19 = arith.constant 0 : index
      %c0_20 = arith.constant 0 : index
      %18 = vector.load %arg9[%c0_19, %c0_20] : memref<1x256xf32, #tpu.memory_space<vmem>>, vector<1x256xf32>
      tpu.vector_store %arg9[%c0_19, %c0_20], %17 {strides = array<i32>} : memref<1x256xf32, #tpu.memory_space<vmem>>, vector<1x256xf32>,
      %c0_21 = arith.constant 0 : index
      %c0_22 = arith.constant 0 : index
      %19 = vector.load %arg8[%c0_21, %c0_22] : memref<1x256xf32, #tpu.memory_space<vmem>>, vector<1x256xf32>
      tpu.vector_store %arg8[%c0_21, %c0_22], %17 {strides = array<i32>} : memref<1x256xf32, #tpu.memory_space<vmem>>, vector<1x256xf32>,
    } else {
    }
    %c0 = arith.constant 0 : index
    %c0_1 = arith.constant 0 : index
    %3 = vector.load %arg9[%c0, %c0_1] : memref<1x256xf32, #tpu.memory_space<vmem>>, vector<1x256xf32>
    %c0_2 = arith.constant 0 : index
    %c0_3 = arith.constant 0 : index
    %4 = vector.load %arg6[%c0_2, %c0_3] : memref<256x128xf32, #tpu.memory_space<vmem>>, vector<256x128xf32>
    %cst = arith.constant dense<0.000000e+00> : vector<1x128xf32>
    %5 = tpu.matmul %3, %4, %cst {dimension_numbers = #tpu.dot_dimension_numbers<[1], [0], [0], [1], [0, 0, 1, 1], [], []>} : vector<1x256xf32>, vector<256x128xf32>, vector<1x128xf32> -> vector<1x128xf32>
    %c0_4 = arith.constant 0 : index
    %c0_5 = arith.constant 0 : index
    %6 = vector.load %arg7[%c0_4, %c0_5] : memref<1x128xf32, #tpu.memory_space<vmem>>, vector<1x128xf32>
    tpu.vector_store %arg7[%c0_4, %c0_5], %5 {strides = array<i32>} : memref<1x128xf32, #tpu.memory_space<vmem>>, vector<1x128xf32>,
    return
  }
  func.func @transform_0(%arg0: i32) -> (i32, i32) {
    %c0_i32 = arith.constant 0 : i32
    %c0_i32_0 = arith.constant 0 : i32
    %c0_i32_1 = arith.constant 0 : i32
    return %c0_i32, %c0_i32_0 : i32, i32
  }
  func.func @transform_1(%arg0: i32) -> (i32, i32) {
    %c0_i32 = arith.constant 0 : i32
    %c0_i32_0 = arith.constant 0 : i32
    %c0_i32_1 = arith.constant 0 : i32
    return %c0_i32, %c0_i32_0 : i32, i32
  }
  func.func @transform_2(%arg0: i32) -> (i32, i32) {
    %c0_i32 = arith.constant 0 : i32
    %c0_i32_0 = arith.constant 0 : i32
    %c0_i32_1 = arith.constant 0 : i32
    return %c0_i32, %c0_i32_0 : i32, i32
  }
  func.func @transform_3(%arg0: i32) -> (i32, i32) {
    %c0_i32 = arith.constant 0 : i32
    %c0_i32_0 = arith.constant 0 : i32
    %c0_i32_1 = arith.constant 0 : i32
    return %c0_i32, %c0_i32_0 : i32, i32
  }
  func.func @transform_4(%arg0: i32) -> (i32, i32) {
    %c0_i32 = arith.constant 0 : i32
    %c0_i32_0 = arith.constant 0 : i32
    %c0_i32_1 = arith.constant 0 : i32
    return %c0_i32, %c0_i32_0 : i32, i32
  }
  func.func @transform_5(%arg0: i32) -> (i32, i32) {
    %c0_i32 = arith.constant 0 : i32
    %c0_i32_0 = arith.constant 0 : i32
    return %c0_i32, %arg0 : i32, i32
  }
  func.func @transform_6(%arg0: i32) -> (i32, i32) {
    %c0_i32 = arith.constant 0 : i32
    %c0_i32_0 = arith.constant 0 : i32
    return %c0_i32, %arg0 : i32, i32
  }
  func.func @transform_7(%arg0: i32) -> (i32, i32) {
    %c0_i32 = arith.constant 0 : i32
    %c0_i32_0 = arith.constant 0 : i32
    %c0_i32_1 = arith.constant 0 : i32
    return %c0_i32, %c0_i32_0 : i32, i32
  }
}

</mosaic_0001>

<llo_original>
// kernel: tpu_custom_call.1
$region0: #{tpu_custom_call.1}
  #allocation0 [shape = 'u32[]', space=smem, size = 0x4, offset = 0x4, fixed_abs, tag = 'smem constant byte address 0x4 - core index']
  #allocation1 [shape = 'u32[144,128]{1,0:T(1,128)}', space=vmem, size = 0x12000, scoped, tag = 'internal scratch']
  #allocation2 [shape = 'f32[1,256]{1,0:T(1,128)}', space=vmem, size = 0x400, scoped, tag = 'scratch operand']
  %s0 = inlined_call_operand.hbm [shape: f32[1,32], index: 0, kind: input, shape index: {}]
  %s1 = inlined_call_operand.hbm [shape: f32[32,128], index: 1, kind: input, shape index: {}]
  %s2 = inlined_call_operand.vmem [shape: f32[1,128], index: 2, kind: input, shape index: {}]
  %s3 = inlined_call_operand.hbm [shape: f32[128,256], index: 3, kind: input, shape index: {}]
  %s4 = inlined_call_operand.vmem [shape: f32[1,256], index: 4, kind: input, shape index: {}]
  %s5 = inlined_call_operand.hbm [shape: f32[256,256], index: 5, kind: input, shape index: {}]
  %s6 = inlined_call_operand.hbm [shape: f32[1,256], index: 6, kind: output, shape index: {0}]
  %s7 = inlined_call_operand.hbm [shape: f32[1,256], index: 7, kind: output, shape index: {1}]
  %8 = xla_tuple %s6, %s7
  %s9 = sld [smem:[#allocation0]]
  $region85: #{tpu_custom_call.1} parent=0
    _
  %s11 = ssub.s32 1, %s9
  %s12 = scalar_select 0, %s11, %s9
  $region1: #{tpu_custom_call.1} parent=0
    #allocation3 [shape = 'u8[512]{0}', space=vmem, size = 0x400, scoped, tag = 'input window, operand 0, single buffered']
    #allocation4 [shape = 's32[2]{0}', space=sflag, size = 0x8, scoped, tag = 'scoped memory for tpu_custom_call.1']
    #allocation5 [shape = 's32[2]{0}', space=sflag, size = 0x8, scoped, tag = 'scoped memory for tpu_custom_call.1']
    #allocation6 [shape = 'u8[16384]{0}', space=vmem, size = 0x4000, scoped, tag = 'input window, operand 1, single buffered']
    #allocation7 [shape = 's32[1]{0}', space=sflag, size = 0x4, scoped, tag = 'scoped memory for tpu_custom_call.1']
    #allocation8 [shape = 'u8[131072]{0}', space=vmem, size = 0x20000, scoped, tag = 'input window, operand 3, single buffered']
    #allocation9 [shape = 'u8[262144]{0}', space=vmem, size = 0x40000, scoped, tag = 'input window, operand 5']
    #allocation10 [shape = 's32[2]{0}', space=sflag, size = 0x8, scoped, tag = 'scoped memory for tpu_custom_call.1']
    #allocation11 [shape = 'u8[1024]{0}', space=vmem, size = 0x400, scoped, tag = 'output window, operand 0']
    #allocation12 [shape = 'u8[1024]{0}', space=vmem, size = 0x400, scoped, tag = 'output window, operand 1, single buffered']
    #allocation13 [shape = 's32[1]{0}', space=sflag, size = 0x4, scoped, tag = 'scoped memory for tpu_custom_call.1']
    %13 = vsyncpa [#allocation4], 0
    %14 = vsyncpa [#allocation7], 0
    %15 = vsyncpa [#allocation10], 0
    %s16 = scalar_lea.sflag [#allocation10], 1
    %17 = vsyncpa %s16, 0
    %18 = vsyncpa [#allocation5], 0
    %s19 = scalar_lea.sflag [#allocation5], 1
    %20 = vsyncpa %s19, 0
    %21 = vsyncpa [#allocation13], 0
    loop: start=0, step=1, limit=4
    $region2: #{tpu_custom_call.1} parent=1 // loop_pre_header
      _
    $region3: #{tpu_custom_call.1} parent=1 // loop_header
      %s23 = sphi 0, %s27
      %p24 = scmp.ge.s32.totalorder %s23, 4
      %s31 = sphi 0, %s31
      %s33 = sphi 0, %s31
      %s34 = sphi 0, %s33
      %s48 = sphi 0, %s34
      %s52 = sphi 0, %s52
      %s54 = sphi 0, %s52
      %s55 = sphi 0, %s54
      %s69 = sphi 0, %s55
      %s73 = sphi 0, %s73
      %s75 = sphi 0, %s73
      %s76 = sphi 0, %s75
      %s90 = sphi 0, %s76
      %s94 = sphi 0, %s94
      %s96 = sphi 0, %s94
      %s97 = sphi 0, %s96
      %s111 = sphi 0, %s97
      %s115 = sphi 0, %s115
      %s117 = sphi 0, %s115
      %s118 = sphi 0, %s117
      %s132 = sphi 0, %s118
      %s138 = sphi 0, %s140
      %s141 = sphi 0, %s138
      %s142 = sphi 0, %s141
      %s158 = sphi 0, %s142
      %s164 = sphi 0, %s166
      %s167 = sphi 0, %s164
      %s168 = sphi 0, %s167
      %s184 = sphi 0, %s168
      %s188 = sphi 0, %s188
      %s190 = sphi 0, %s188
      %s191 = sphi 0, %s190
      %s205 = sphi 0, %s191
    $region4: #{tpu_custom_call.1} parent=1 // loop_header_branch
      %26 = sbr.rel (%p24) target = $region8
    $region5: #{tpu_custom_call.1} parent=1 // loop_body
      %s28 = ssub.s32 %s23, 1
      %s29 = ssub.s32 %s23, 2
      %s30 = sadd.s32 %s23, 1
      %s32 = sadd.s32 %s31, 1
      %p35 = scmp.eq.s32.totalorder %s23, 1
      %p36 = scmp.ne.s32.totalorder %s31, %s33
      %p37 = scmp.eq.s32.totalorder %s23, 0
      %p38 = por %p36, %p37
      %p39 = scmp.ne.s32.totalorder %s31, %s33
      %p40 = scmp.eq.s32.totalorder %s28, 1
      %p41 = por %p39, %p40
      %p42 = scmp.ne.s32.totalorder %s33, %s34
      %p43 = scmp.eq.s32.totalorder %s28, 0
      %p44 = por %p42, %p43
      %p45 = scmp.ne.s32.totalorder %s33, %s34
      %p46 = scmp.eq.s32.totalorder %s29, 1
      %p47 = por %p45, %p46
      %p49 = scmp.ne.s32.totalorder %s34, %s48
      %p50 = scmp.eq.s32.totalorder %s29, 0
      %p51 = por %p49, %p50
      %s53 = sadd.s32 %s52, 1
      %p56 = scmp.eq.s32.totalorder %s23, 1
      %p57 = scmp.ne.s32.totalorder %s52, %s54
      %p58 = scmp.eq.s32.totalorder %s23, 0
      %p59 = por %p57, %p58
      %p60 = scmp.ne.s32.totalorder %s52, %s54
      %p61 = scmp.eq.s32.totalorder %s28, 1
      %p62 = por %p60, %p61
      %p63 = scmp.ne.s32.totalorder %s54, %s55
      %p64 = scmp.eq.s32.totalorder %s28, 0
      %p65 = por %p63, %p64
      %p66 = scmp.ne.s32.totalorder %s54, %s55
      %p67 = scmp.eq.s32.totalorder %s29, 1
      %p68 = por %p66, %p67
      %p70 = scmp.ne.s32.totalorder %s55, %s69
      %p71 = scmp.eq.s32.totalorder %s29, 0
      %p72 = por %p70, %p71
      %s74 = sadd.s32 %s73, 1
      %p77 = scmp.eq.s32.totalorder %s23, 1
      %p78 = scmp.ne.s32.totalorder %s73, %s75
      %p79 = scmp.eq.s32.totalorder %s23, 0
      %p80 = por %p78, %p79
      %p81 = scmp.ne.s32.totalorder %s73, %s75
      %p82 = scmp.eq.s32.totalorder %s28, 1
      %p83 = por %p81, %p82
      %p84 = scmp.ne.s32.totalorder %s75, %s76
      %p85 = scmp.eq.s32.totalorder %s28, 0
      %p86 = por %p84, %p85
      %p87 = scmp.ne.s32.totalorder %s75, %s76
      %p88 = scmp.eq.s32.totalorder %s29, 1
      %p89 = por %p87, %p88
      %p91 = scmp.ne.s32.totalorder %s76, %s90
      %p92 = scmp.eq.s32.totalorder %s29, 0
      %p93 = por %p91, %p92
      %s95 = sadd.s32 %s94, 1
      %p98 = scmp.eq.s32.totalorder %s23, 1
      %p99 = scmp.ne.s32.totalorder %s94, %s96
      %p100 = scmp.eq.s32.totalorder %s23, 0
      %p101 = por %p99, %p100
      %p102 = scmp.ne.s32.totalorder %s94, %s96
      %p103 = scmp.eq.s32.totalorder %s28, 1
      %p104 = por %p102, %p103
      %p105 = scmp.ne.s32.totalorder %s96, %s97
      %p106 = scmp.eq.s32.totalorder %s28, 0
      %p107 = por %p105, %p106
      %p108 = scmp.ne.s32.totalorder %s96, %s97
      %p109 = scmp.eq.s32.totalorder %s29, 1
      %p110 = por %p108, %p109
      %p112 = scmp.ne.s32.totalorder %s97, %s111
      %p113 = scmp.eq.s32.totalorder %s29, 0
      %p114 = por %p112, %p113
      %s116 = sadd.s32 %s115, 1
      %p119 = scmp.eq.s32.totalorder %s23, 1
      %p120 = scmp.ne.s32.totalorder %s115, %s117
      %p121 = scmp.eq.s32.totalorder %s23, 0
      %p122 = por %p120, %p121
      %p123 = scmp.ne.s32.totalorder %s115, %s117
      %p124 = scmp.eq.s32.totalorder %s28, 1
      %p125 = por %p123, %p124
      %p126 = scmp.ne.s32.totalorder %s117, %s118
      %p127 = scmp.eq.s32.totalorder %s28, 0
      %p128 = por %p126, %p127
      %p129 = scmp.ne.s32.totalorder %s117, %s118
      %p130 = scmp.eq.s32.totalorder %s29, 1
      %p131 = por %p129, %p130
      %p133 = scmp.ne.s32.totalorder %s118, %s132
      %p134 = scmp.eq.s32.totalorder %s29, 0
      %p135 = por %p133, %p134
      %s136 = ssub.s32 %s23, %s30
      %p137 = scmp.eq.s32.totalorder %s136, 0
      %s139 = sadd.s32 %s138, 1
      %s140 = scalar_select %p137, %s138, %s139
      %p143 = pneg %p137
      %p144 = scmp.eq.s32.totalorder %s23, 1
      %p145 = por %p143, %p144
      %p146 = scmp.ne.s32.totalorder %s138, %s141
      %p147 = scmp.eq.s32.totalorder %s23, 0
      %p148 = por %p146, %p147
      %p149 = scmp.ne.s32.totalorder %s138, %s141
      %p150 = scmp.eq.s32.totalorder %s28, 1
      %p151 = por %p149, %p150
      %p152 = scmp.ne.s32.totalorder %s141, %s142
      %p153 = scmp.eq.s32.totalorder %s28, 0
      %p154 = por %p152, %p153
      %p155 = scmp.ne.s32.totalorder %s141, %s142
      %p156 = scmp.eq.s32.totalorder %s29, 1
      %p157 = por %p155, %p156
      %p159 = scmp.ne.s32.totalorder %s142, %s158
      %p160 = scmp.eq.s32.totalorder %s29, 0
      %p161 = por %p159, %p160
      %s162 = ssub.s32 %s23, %s30
      %p163 = scmp.eq.s32.totalorder %s162, 0
      %s165 = sadd.s32 %s164, 1
      %s166 = scalar_select %p163, %s164, %s165
      %p169 = pneg %p163
      %p170 = scmp.eq.s32.totalorder %s23, 1
      %p171 = por %p169, %p170
      %p172 = scmp.ne.s32.totalorder %s164, %s167
      %p173 = scmp.eq.s32.totalorder %s23, 0
      %p174 = por %p172, %p173
      %p175 = scmp.ne.s32.totalorder %s164, %s167
      %p176 = scmp.eq.s32.totalorder %s28, 1
      %p177 = por %p175, %p176
      %p178 = scmp.ne.s32.totalorder %s167, %s168
      %p179 = scmp.eq.s32.totalorder %s28, 0
      %p180 = por %p178, %p179
      %p181 = scmp.ne.s32.totalorder %s167, %s168
      %p182 = scmp.eq.s32.totalorder %s29, 1
      %p183 = por %p181, %p182
      %p185 = scmp.ne.s32.totalorder %s168, %s184
      %p186 = scmp.eq.s32.totalorder %s29, 0
      %p187 = por %p185, %p186
      %s189 = sadd.s32 %s188, 1
      %p192 = scmp.eq.s32.totalorder %s23, 1
      %p193 = scmp.ne.s32.totalorder %s188, %s190
      %p194 = scmp.eq.s32.totalorder %s23, 0
      %p195 = por %p193, %p194
      %p196 = scmp.ne.s32.totalorder %s188, %s190
      %p197 = scmp.eq.s32.totalorder %s28, 1
      %p198 = por %p196, %p197
      %p199 = scmp.ne.s32.totalorder %s190, %s191
      %p200 = scmp.eq.s32.totalorder %s28, 0
      %p201 = por %p199, %p200
      %p202 = scmp.ne.s32.totalorder %s190, %s191
      %p203 = scmp.eq.s32.totalorder %s29, 1
      %p204 = por %p202, %p203
      %p206 = scmp.ne.s32.totalorder %s191, %s205
      %p207 = scmp.eq.s32.totalorder %s29, 0
      %p208 = por %p206, %p207
      %p209 = scmp.le.s32.totalorder 1, %s23
      %p210 = scmp.lt.s32.totalorder %s23, 3
      %p211 = pnand %p209, %p210
      %p212 = pneg %p211
      // Predicated region
      $region9: #{tpu_custom_call.1} parent=5 // pred_check
        _
      $region10: #{tpu_custom_call.1} parent=5 // pred_check_branch
        %214 = sbr.rel (%p211) target = $region12
      $region11: #{tpu_custom_call.1} parent=5 // pred_region
        %s215 = ssub.s32 %s23, 1
        // Predicated region
        $region13: #{tpu_custom_call.1} parent=11 // pred_check
          %p216 = pneg %p44
        $region14: #{tpu_custom_call.1} parent=11 // pred_check_branch
          %218 = sbr.rel (%p216) target = $region16
        $region15: #{tpu_custom_call.1} parent=11 // pred_region
          %s220 = ssub.s32 16, 16
          %221 = vsyncadd [#allocation4], %s220
          %s223 = sshll.u32 [#allocation3], 4
          %s224 = int_to_ptr.vmem [resolvable:$true] %s223
          %226 = dma.hbm_to_vmem [thread:$0]  %s0, 16, %s224, [#allocation4]
        $region16: #{tpu_custom_call.1} parent=11 // pred_fallthru
          _
        // Predicated region
        $region17: #{tpu_custom_call.1} parent=11 // pred_check
          %p227 = pneg %p65
        $region18: #{tpu_custom_call.1} parent=11 // pred_check_branch
          %229 = sbr.rel (%p227) target = $region20
        $region19: #{tpu_custom_call.1} parent=11 // pred_region
          %s231 = ssub.s32 512, 512
          %232 = vsyncadd [#allocation7], %s231
          %s233 = sshll.u32 [#allocation6], 4
          %s234 = int_to_ptr.vmem [resolvable:$true] %s233
          %239 = dma.hbm_to_vmem [thread:$0]  %s1, 512, %s234, [#allocation7], 128, 128, 8
        $region20: #{tpu_custom_call.1} parent=11 // pred_fallthru
          _
        // Predicated region
        $region21: #{tpu_custom_call.1} parent=11 // pred_check
          %p240 = pneg %p86
        $region22: #{tpu_custom_call.1} parent=11 // pred_check_branch
          %242 = sbr.rel (%p240) target = $region24
        $region23: #{tpu_custom_call.1} parent=11 // pred_region
          _
        $region24: #{tpu_custom_call.1} parent=11 // pred_fallthru
          _
        // Predicated region
        $region25: #{tpu_custom_call.1} parent=11 // pred_check
          %p243 = pneg %p107
        $region26: #{tpu_custom_call.1} parent=11 // pred_check_branch
          %245 = sbr.rel (%p243) target = $region28
        $region27: #{tpu_custom_call.1} parent=11 // pred_region
          %s247 = ssub.s32 4096, 4096
          %248 = vsyncadd [#allocation7], %s247
          %s249 = sshll.u32 [#allocation8], 4
          %s250 = int_to_ptr.vmem [resolvable:$true] %s249
          %255 = dma.hbm_to_vmem [thread:$0]  %s3, 4096, %s250, [#allocation7], 256, 256, 16
        $region28: #{tpu_custom_call.1} parent=11 // pred_fallthru
          _
        // Predicated region
        $region29: #{tpu_custom_call.1} parent=11 // pred_check
          %p256 = pneg %p128
        $region30: #{tpu_custom_call.1} parent=11 // pred_check_branch
          %258 = sbr.rel (%p256) target = $region32
        $region31: #{tpu_custom_call.1} parent=11 // pred_region
          _
        $region32: #{tpu_custom_call.1} parent=11 // pred_fallthru
          _
      $region12: #{tpu_custom_call.1} parent=5 // pred_fallthru
        _
      %p259 = scmp.lt.s32.totalorder %s23, 2
      // Predicated region
      $region33: #{tpu_custom_call.1} parent=5 // pred_check
        %p260 = pneg %p259
      $region34: #{tpu_custom_call.1} parent=5 // pred_check_branch
        %262 = sbr.rel (%p260) target = $region36
      $region35: #{tpu_custom_call.1} parent=5 // pred_region
        // Predicated region
        $region37: #{tpu_custom_call.1} parent=35 // pred_check
          %p263 = pneg %p148
        $region38: #{tpu_custom_call.1} parent=35 // pred_check_branch
          %265 = sbr.rel (%p263) target = $region40
        $region39: #{tpu_custom_call.1} parent=35 // pred_region
          %s266 = sand.u32 %s138, 1
          %s267 = scalar_lea.sflag [#allocation10], %s266
          %s268 = sand.u32 %s138, 1
          %s269 = smul.addr %s268, 256
          %s270 = scalar_lea.vmem [#allocation9], %s269
          %s272 = ssub.s32 4096, 4096
          %273 = vsyncadd %s267, %s272
          %s274 = smul.addr %s23, 128
          %s275 = scalar_lea.hbm %s5, %s274
          %s276 = sshll.u32 %s270, 4
          %s277 = int_to_ptr.vmem [resolvable:$true] %s276
          %282 = dma.hbm_to_vmem [thread:$0]  %s275, 4096, %s277, %s267, 256, 128, 8
        $region40: #{tpu_custom_call.1} parent=35 // pred_fallthru
          _
      $region36: #{tpu_custom_call.1} parent=5 // pred_fallthru
        _
      %p283 = scmp.le.s32.totalorder 1, %s23
      %p284 = scmp.lt.s32.totalorder %s23, 3
      %p285 = pnand %p283, %p284
      %p286 = pneg %p285
      // Predicated region
      $region41: #{tpu_custom_call.1} parent=5 // pred_check
        _
      $region42: #{tpu_custom_call.1} parent=5 // pred_check_branch
        %288 = sbr.rel (%p285) target = $region44
      $region43: #{tpu_custom_call.1} parent=5 // pred_region
        %s289 = ssub.s32 %s23, 1
        // Predicated region
        $region45: #{tpu_custom_call.1} parent=43 // pred_check
          %p290 = pneg %p44
        $region46: #{tpu_custom_call.1} parent=43 // pred_check_branch
          %292 = sbr.rel (%p290) target = $region48
        $region47: #{tpu_custom_call.1} parent=43 // pred_region
          %293 = dma.done [#allocation4], 16
        $region48: #{tpu_custom_call.1} parent=43 // pred_fallthru
          _
        // Predicated region
        $region49: #{tpu_custom_call.1} parent=43 // pred_check
          %p294 = pneg %p65
        $region50: #{tpu_custom_call.1} parent=43 // pred_check_branch
          %296 = sbr.rel (%p294) target = $region52
        $region51: #{tpu_custom_call.1} parent=43 // pred_region
          %297 = dma.done [#allocation7], 512
        $region52: #{tpu_custom_call.1} parent=43 // pred_fallthru
          _
        // Predicated region
        $region53: #{tpu_custom_call.1} parent=43 // pred_check
          %p298 = pneg %p107
        $region54: #{tpu_custom_call.1} parent=43 // pred_check_branch
          %300 = sbr.rel (%p298) target = $region56
        $region55: #{tpu_custom_call.1} parent=43 // pred_region
          %301 = dma.done [#allocation7], 4096
        $region56: #{tpu_custom_call.1} parent=43 // pred_fallthru
          _
        %s302 = sand.u32 %s141, 1
        %s303 = scalar_lea.sflag [#allocation10], %s302
        %s304 = sand.u32 %s141, 1
        %s305 = smul.addr %s304, 256
        %s306 = scalar_lea.vmem [#allocation9], %s305
        // Predicated region
        $region57: #{tpu_custom_call.1} parent=43 // pred_check
          %p307 = pneg %p154
        $region58: #{tpu_custom_call.1} parent=43 // pred_check_branch
          %309 = sbr.rel (%p307) target = $region60
        $region59: #{tpu_custom_call.1} parent=43 // pred_region
          %310 = dma.done %s303, 4096
        $region60: #{tpu_custom_call.1} parent=43 // pred_fallthru
          _
        %p311 = pneg %p44
        %p312 = pneg %p41
        %p313 = pneg %p65
        %p314 = pneg %p62
        %p315 = pneg %p86
        %p316 = pneg %p83
        %p317 = pneg %p107
        %p318 = pneg %p104
        %p319 = pneg %p128
        %p320 = pneg %p125
        %s321 = sand.u32 %s141, 1
        %s322 = scalar_lea.sflag [#allocation10], %s321
        %s323 = sand.u32 %s141, 1
        %s324 = smul.addr %s323, 256
        %s325 = scalar_lea.vmem [#allocation9], %s324
        %p326 = pneg %p154
        %p327 = pneg %p151
        %p328 = pneg %p180
        %p329 = pneg %p177
        %s330 = sand.u32 %s167, 1
        %s331 = scalar_lea.sflag [#allocation5], %s330
        %s332 = sand.u32 %s167, 1
        %s333 = scalar_lea.vmem [#allocation11], %s332
        %p334 = pneg %p201
        %p335 = pneg %p198
        %p336 = scmp.eq.s32.totalorder %s28, 0
        // Predicated region
        $region61: #{tpu_custom_call.1} parent=43 // pred_check
          %p337 = pneg %p336
        $region62: #{tpu_custom_call.1} parent=43 // pred_check_branch
          %339 = sbr.rel (%p337) target = $region64
        $region63: #{tpu_custom_call.1} parent=43 // pred_region
          %v340 = vld [vmem:[#allocation3] sm:$0x1]
          %v341 = vld [vmem:[#allocation6] sm:$0xff]
          %v342 = vld [vmem:[#allocation6 + $0x8] sm:$0xff]
          %v343 = vld [vmem:[#allocation6 + $0x10] sm:$0xff]
          %v344 = vld [vmem:[#allocation6 + $0x18] sm:$0xff]
          %v345 = vld [vmem:[%s2] sm:$0x1]
          %vm346 = vcmask 261120
          %v348 = vsel %vm346, %v340, 0
          %350 = vmatprep.subr.mxu0 0.0
          %351 = vmatpush1.msra.mxu0 %v341
          %352 = vmatprep.subr.mxu0 0.0
          %353 = vmatpush1.msra.mxu0 %v342
          %354 = vmatprep.subr.mxu0 0.0
          %355 = vmatpush1.msra.mxu0 %v343
          %356 = vmatprep.subr.mxu0 0.0
          %357 = vmatpush1.msra.mxu0 %v344
          %358 = vmatprep.subr.mxu0 0.0
          %359 = vmatpush1.msra.mxu0 0.0
          %360 = vmatprep.subr.mxu0 0.0
          %361 = vmatpush1.msra.mxu0 0.0
          %362 = vmatprep.subr.mxu0 0.0
          %363 = vmatpush1.msra.mxu0 0.0
          %364 = vmatprep.subr.mxu0 0.0
          %365 = vmatpush1.msra.mxu0 0.0
          %366 = vmatprep.subr.mxu0 0.0
          %367 = vmatpush1.msra.mxu0 0.0
          %368 = vmatprep.subr.mxu0 0.0
          %369 = vmatpush1.msra.mxu0 0.0
          %370 = vmatprep.subr.mxu0 0.0
          %371 = vmatpush1.msra.mxu0 0.0
          %372 = vmatprep.subr.mxu0 0.0
          %373 = vmatpush1.msra.mxu0 0.0
          %374 = vmatprep.subr.mxu0 0.0
          %375 = vmatpush1.msra.mxu0 0.0
          %376 = vmatprep.subr.mxu0 0.0
          %377 = vmatpush1.msra.mxu0 0.0
          %378 = vmatprep.subr.mxu0 0.0
          %379 = vmatpush1.msra.mxu0 0.0
          %380 = vmatprep.subr.mxu0 0.0
          %381 = vmatpush1.msra.mxu0 0.0
          %382 = vmatprep.subr.mxu0 0.0
          %383 = vmatpush1.msra.mxu0 0.0
          %384 = vmatprep.subr.mxu0 0.0
          %385 = vmatpush1.msra.mxu0 0.0
          %386 = vmatprep.subr.mxu0 0.0
          %387 = vmatpush1.msra.mxu0 0.0
          %388 = vmatprep.subr.mxu0 0.0
          %389 = vmatpush1.msra.mxu0 0.0
          %390 = vmatprep.subr.mxu0 0.0
          %391 = vmatpush1.msra.mxu0 0.0
          %392 = vmatprep.subr.mxu0 0.0
          %393 = vmatpush1.msra.mxu0 0.0
          %394 = vmatprep.subr.mxu0 0.0
          %395 = vmatpush1.msra.mxu0 0.0
          %396 = vmatprep.subr.mxu0 0.0
          %397 = vmatpush1.msra.mxu0 0.0
          %398 = vmatprep.subr.mxu0 0.0
          %399 = vmatpush1.msra.mxu0 0.0
          %400 = vmatprep.subr.mxu0 0.0
          %401 = vmatpush1.msra.mxu0 0.0
          %402 = vmatprep.subr.mxu0 0.0
          %403 = vmatpush1.msra.mxu0 0.0
          %404 = vmatprep.subr.mxu0 0.0
          %405 = vmatpush1.msra.mxu0 0.0
          %406 = vmatprep.subr.mxu0 0.0
          %407 = vmatpush1.msra.mxu0 0.0
          %408 = vmatprep.subr.mxu0 0.0
          %409 = vmatpush1.msra.mxu0 0.0
          %410 = vmatprep.subr.mxu0 0.0
          %411 = vmatpush1.msra.mxu0 0.0
          %412 = vmatprep.subr.mxu0 0.0
          %413 = vmatpush1.msra.mxu0 0.0
          %414 = vmatprep.mubr.f32.mxu0 0.0
          %415 = vmatmul.mubr.f32.gmra.mrb[0].mxu0 %v348
          %v416 = vpop.f32.mrb[0].mxu0
          %v417 = vadd.f32 %v345, %v416
          %v418 = vpop.f32.mrb[0].mxu0
          %419 = vdwg.mxu0
          %v420 = vmax.f32 %v417, 0.0
          %v421 = vld [vmem:[#allocation8] sm:$0xff]
          %v422 = vld [vmem:[#allocation8 + $0x8] sm:$0xff]
          %v423 = vld [vmem:[#allocation8 + $0x10] sm:$0xff]
          %v424 = vld [vmem:[#allocation8 + $0x18] sm:$0xff]
          %v425 = vld [vmem:[#allocation8 + $0x20] sm:$0xff]
          %v426 = vld [vmem:[#allocation8 + $0x28] sm:$0xff]
          %v427 = vld [vmem:[#allocation8 + $0x30] sm:$0xff]
          %v428 = vld [vmem:[#allocation8 + $0x38] sm:$0xff]
          %v429 = vld [vmem:[#allocation8 + $0x40] sm:$0xff]
          %v430 = vld [vmem:[#allocation8 + $0x48] sm:$0xff]
          %v431 = vld [vmem:[#allocation8 + $0x50] sm:$0xff]
          %v432 = vld [vmem:[#allocation8 + $0x58] sm:$0xff]
          %v433 = vld [vmem:[#allocation8 + $0x60] sm:$0xff]
          %v434 = vld [vmem:[#allocation8 + $0x68] sm:$0xff]
          %v435 = vld [vmem:[#allocation8 + $0x70] sm:$0xff]
          %v436 = vld [vmem:[#allocation8 + $0x78] sm:$0xff]
          %v437 = vld [vmem:[#allocation8 + $0x80] sm:$0xff]
          %v438 = vld [vmem:[#allocation8 + $0x88] sm:$0xff]
          %v439 = vld [vmem:[#allocation8 + $0x90] sm:$0xff]
          %v440 = vld [vmem:[#allocation8 + $0x98] sm:$0xff]
          %v441 = vld [vmem:[#allocation8 + $0xa0] sm:$0xff]
          %v442 = vld [vmem:[#allocation8 + $0xa8] sm:$0xff]
          %v443 = vld [vmem:[#allocation8 + $0xb0] sm:$0xff]
          %v444 = vld [vmem:[#allocation8 + $0xb8] sm:$0xff]
          %v445 = vld [vmem:[#allocation8 + $0xc0] sm:$0xff]
          %v446 = vld [vmem:[#allocation8 + $0xc8] sm:$0xff]
          %v447 = vld [vmem:[#allocation8 + $0xd0] sm:$0xff]
          %v448 = vld [vmem:[#allocation8 + $0xd8] sm:$0xff]
          %v449 = vld [vmem:[#allocation8 + $0xe0] sm:$0xff]
          %v450 = vld [vmem:[#allocation8 + $0xe8] sm:$0xff]
          %v451 = vld [vmem:[#allocation8 + $0xf0] sm:$0xff]
          %v452 = vld [vmem:[#allocation8 + $0xf8] sm:$0xff]
          %v453 = vld [vmem:[%s4] sm:$0x3]
          %v455 = vlaneseq
          %v456 = vshrl.u32 %v455, 7
          %v457 = vsub.s32 0, %v456
          %v458 = vrot.slane %v453, %v457
          %v459 = vlaneseq
          %v460 = vshrl.u32 %v459, 7
          %v461 = vsub.s32 1, %v460
          %v462 = vrot.slane %v453, %v461
          %465 = vmatprep.subr.mxu0 %v422
          %466 = vmatpush1.msra.mxu0 %v421
          %467 = vmatprep.subr.mxu0 %v424
          %468 = vmatpush1.msra.mxu0 %v423
          %469 = vmatprep.subr.mxu0 %v426
          %470 = vmatpush1.msra.mxu0 %v425
          %471 = vmatprep.subr.mxu0 %v428
          %472 = vmatpush1.msra.mxu0 %v427
          %473 = vmatprep.subr.mxu0 %v430
          %474 = vmatpush1.msra.mxu0 %v429
          %475 = vmatprep.subr.mxu0 %v432
          %476 = vmatpush1.msra.mxu0 %v431
          %477 = vmatprep.subr.mxu0 %v434
          %478 = vmatpush1.msra.mxu0 %v433
          %479 = vmatprep.subr.mxu0 %v436
          %480 = vmatpush1.msra.mxu0 %v435
          %481 = vmatprep.subr.mxu0 %v438
          %482 = vmatpush1.msra.mxu0 %v437
          %483 = vmatprep.subr.mxu0 %v440
          %484 = vmatpush1.msra.mxu0 %v439
          %485 = vmatprep.subr.mxu0 %v442
          %486 = vmatpush1.msra.mxu0 %v441
          %487 = vmatprep.subr.mxu0 %v444
          %488 = vmatpush1.msra.mxu0 %v443
          %489 = vmatprep.subr.mxu0 %v446
          %490 = vmatpush1.msra.mxu0 %v445
          %491 = vmatprep.subr.mxu0 %v448
          %492 = vmatpush1.msra.mxu0 %v447
          %493 = vmatprep.subr.mxu0 %v450
          %494 = vmatpush1.msra.mxu0 %v449
          %495 = vmatprep.subr.mxu0 %v452
          %496 = vmatpush1.msra.mxu0 %v451
          %497 = vmatprep.subr.mxu0 0.0
          %498 = vmatpush1.msra.mxu0 0.0
          %499 = vmatprep.subr.mxu0 0.0
          %500 = vmatpush1.msra.mxu0 0.0
          %501 = vmatprep.subr.mxu0 0.0
          %502 = vmatpush1.msra.mxu0 0.0
          %503 = vmatprep.subr.mxu0 0.0
          %504 = vmatpush1.msra.mxu0 0.0
          %505 = vmatprep.subr.mxu0 0.0
          %506 = vmatpush1.msra.mxu0 0.0
          %507 = vmatprep.subr.mxu0 0.0
          %508 = vmatpush1.msra.mxu0 0.0
          %509 = vmatprep.subr.mxu0 0.0
          %510 = vmatpush1.msra.mxu0 0.0
          %511 = vmatprep.subr.mxu0 0.0
          %512 = vmatpush1.msra.mxu0 0.0
          %513 = vmatprep.subr.mxu0 0.0
          %514 = vmatpush1.msra.mxu0 0.0
          %515 = vmatprep.subr.mxu0 0.0
          %516 = vmatpush1.msra.mxu0 0.0
          %517 = vmatprep.subr.mxu0 0.0
          %518 = vmatpush1.msra.mxu0 0.0
          %519 = vmatprep.subr.mxu0 0.0
          %520 = vmatpush1.msra.mxu0 0.0
          %521 = vmatprep.subr.mxu0 0.0
          %522 = vmatpush1.msra.mxu0 0.0
          %523 = vmatprep.subr.mxu0 0.0
          %524 = vmatpush1.msra.mxu0 0.0
          %525 = vmatprep.subr.mxu0 0.0
          %526 = vmatpush1.msra.mxu0 0.0
          %527 = vmatprep.subr.mxu0 0.0
          %528 = vmatpush1.msra.mxu0 0.0
          %529 = vmatprep.mubr.f32.mxu0 0.0
          %530 = vmatmul.mubr.f32.gmra.mrb[0].mxu0 %v420
          %v531 = vpop.f32.mrb[0].mxu0
          %v532 = vadd.f32 %v458, %v531
          %v533 = vpop.f32.mrb[0].mxu0
          %v534 = vadd.f32 %v462, %v533
          %535 = vdwg.mxu0
          %v538 = vcombine.low %v532, %v534
          %v540 = vunpack.c.l.s4 1966171168
          %v541 = vunpack.c.0.s8 %v540
          %v542 = vlaneseq
          %v543 = vshrl.u32 %v542, 7
          %v544 = vsub.s32 %v541, %v543
          %v545 = vrot.slane %v538, %v544
          %v547 = vunpack.c.l.s4 1966171168
          %v548 = vunpack.c.0.s8 %v547
          %v549 = vlaneseq
          %v550 = vshrl.u32 %v549, 7
          %v551 = vsub.s32 %v548, %v550
          %v552 = vrot.slane %v545, %v551
          %v554 = vlaneseq
          %vm555 = vcmp.ge.s32.totalorder %v554, 0
          %vm556 = vcmp.lt.s32.totalorder %v554, 256
          %vm557 = vmand %vm555, %vm556
          %558 = vst.msk [vmem:[#allocation2] sm:$0x3] %vm557, %v552
          %559 = vst.msk [vmem:[#allocation12] sm:$0x3] %vm557, %v552
        $region64: #{tpu_custom_call.1} parent=43 // pred_fallthru
          _
        %v560 = vld [vmem:[#allocation2] sm:$0x3]
        %v561 = vld [vmem:[%s306] sm:$0xff]
        %v562 = vld [vmem:[%s306 + $0x8] sm:$0xff]
        %v563 = vld [vmem:[%s306 + $0x10] sm:$0xff]
        %v564 = vld [vmem:[%s306 + $0x18] sm:$0xff]
        %v565 = vld [vmem:[%s306 + $0x20] sm:$0xff]
        %v566 = vld [vmem:[%s306 + $0x28] sm:$0xff]
        %v567 = vld [vmem:[%s306 + $0x30] sm:$0xff]
        %v568 = vld [vmem:[%s306 + $0x38] sm:$0xff]
        %v569 = vld [vmem:[%s306 + $0x40] sm:$0xff]
        %v570 = vld [vmem:[%s306 + $0x48] sm:$0xff]
        %v571 = vld [vmem:[%s306 + $0x50] sm:$0xff]
        %v572 = vld [vmem:[%s306 + $0x58] sm:$0xff]
        %v573 = vld [vmem:[%s306 + $0x60] sm:$0xff]
        %v574 = vld [vmem:[%s306 + $0x68] sm:$0xff]
        %v575 = vld [vmem:[%s306 + $0x70] sm:$0xff]
        %v576 = vld [vmem:[%s306 + $0x78] sm:$0xff]
        %v577 = vld [vmem:[%s306 + $0x80] sm:$0xff]
        %v578 = vld [vmem:[%s306 + $0x88] sm:$0xff]
        %v579 = vld [vmem:[%s306 + $0x90] sm:$0xff]
        %v580 = vld [vmem:[%s306 + $0x98] sm:$0xff]
        %v581 = vld [vmem:[%s306 + $0xa0] sm:$0xff]
        %v582 = vld [vmem:[%s306 + $0xa8] sm:$0xff]
        %v583 = vld [vmem:[%s306 + $0xb0] sm:$0xff]
        %v584 = vld [vmem:[%s306 + $0xb8] sm:$0xff]
        %v585 = vld [vmem:[%s306 + $0xc0] sm:$0xff]
        %v586 = vld [vmem:[%s306 + $0xc8] sm:$0xff]
        %v587 = vld [vmem:[%s306 + $0xd0] sm:$0xff]
        %v588 = vld [vmem:[%s306 + $0xd8] sm:$0xff]
        %v589 = vld [vmem:[%s306 + $0xe0] sm:$0xff]
        %v590 = vld [vmem:[%s306 + $0xe8] sm:$0xff]
        %v591 = vld [vmem:[%s306 + $0xf0] sm:$0xff]
        %v592 = vld [vmem:[%s306 + $0xf8] sm:$0xff]
        %v594 = vlaneseq
        %v595 = vshrl.u32 %v594, 7
        %v596 = vsub.s32 0, %v595
        %v597 = vrot.slane %v560, %v596
        %v598 = vlaneseq
        %v599 = vshrl.u32 %v598, 7
        %v600 = vsub.s32 1, %v599
        %v601 = vrot.slane %v560, %v600
        %604 = vmatprep.subr.mxu0 0.0
        %605 = vmatpush1.msra.mxu0 %v561
        %606 = vmatprep.subr.mxu0 0.0
        %607 = vmatpush1.msra.mxu0 %v562
        %608 = vmatprep.subr.mxu0 0.0
        %609 = vmatpush1.msra.mxu0 %v563
        %610 = vmatprep.subr.mxu0 0.0
        %611 = vmatpush1.msra.mxu0 %v564
        %612 = vmatprep.subr.mxu0 0.0
        %613 = vmatpush1.msra.mxu0 %v565
        %614 = vmatprep.subr.mxu0 0.0
        %615 = vmatpush1.msra.mxu0 %v566
        %616 = vmatprep.subr.mxu0 0.0
        %617 = vmatpush1.msra.mxu0 %v567
        %618 = vmatprep.subr.mxu0 0.0
        %619 = vmatpush1.msra.mxu0 %v568
        %620 = vmatprep.subr.mxu0 0.0
        %621 = vmatpush1.msra.mxu0 %v569
        %622 = vmatprep.subr.mxu0 0.0
        %623 = vmatpush1.msra.mxu0 %v570
        %624 = vmatprep.subr.mxu0 0.0
        %625 = vmatpush1.msra.mxu0 %v571
        %626 = vmatprep.subr.mxu0 0.0
        %627 = vmatpush1.msra.mxu0 %v572
        %628 = vmatprep.subr.mxu0 0.0
        %629 = vmatpush1.msra.mxu0 %v573
        %630 = vmatprep.subr.mxu0 0.0
        %631 = vmatpush1.msra.mxu0 %v574
        %632 = vmatprep.subr.mxu0 0.0
        %633 = vmatpush1.msra.mxu0 %v575
        %634 = vmatprep.subr.mxu0 0.0
        %635 = vmatpush1.msra.mxu0 %v576
        %636 = vmatprep.subr.mxu0 0.0
        %637 = vmatpush1.msra.mxu0 %v577
        %638 = vmatprep.subr.mxu0 0.0
        %639 = vmatpush1.msra.mxu0 %v578
        %640 = vmatprep.subr.mxu0 0.0
        %641 = vmatpush1.msra.mxu0 %v579
        %642 = vmatprep.subr.mxu0 0.0
        %643 = vmatpush1.msra.mxu0 %v580
        %644 = vmatprep.subr.mxu0 0.0
        %645 = vmatpush1.msra.mxu0 %v581
        %646 = vmatprep.subr.mxu0 0.0
        %647 = vmatpush1.msra.mxu0 %v582
        %648 = vmatprep.subr.mxu0 0.0
        %649 = vmatpush1.msra.mxu0 %v583
        %650 = vmatprep.subr.mxu0 0.0
        %651 = vmatpush1.msra.mxu0 %v584
        %652 = vmatprep.subr.mxu0 0.0
        %653 = vmatpush1.msra.mxu0 %v585
        %654 = vmatprep.subr.mxu0 0.0
        %655 = vmatpush1.msra.mxu0 %v586
        %656 = vmatprep.subr.mxu0 0.0
        %657 = vmatpush1.msra.mxu0 %v587
        %658 = vmatprep.subr.mxu0 0.0
        %659 = vmatpush1.msra.mxu0 %v588
        %660 = vmatprep.subr.mxu0 0.0
        %661 = vmatpush1.msra.mxu0 %v589
        %662 = vmatprep.subr.mxu0 0.0
        %663 = vmatpush1.msra.mxu0 %v590
        %664 = vmatprep.subr.mxu0 0.0
        %665 = vmatpush1.msra.mxu0 %v591
        %666 = vmatprep.subr.mxu0 0.0
        %667 = vmatpush1.msra.mxu0 %v592
        %668 = vmatprep.mubr.f32.mxu0 %v601
        %669 = vmatmul.mubr.f32.gmra.mrb[0].mxu0 %v597
        %v670 = vpop.f32.mrb[0].mxu0
        %v671 = vadd.f32 0.0, %v670
        %v672 = vpop.f32.mrb[0].mxu0
        %673 = vdwg.mxu0
        %674 = vst [vmem:[%s333] sm:$0x1] %v671
        %s675 = sand.u32 %s167, 1
        %s676 = scalar_lea.sflag [#allocation5], %s675
        %s677 = sand.u32 %s167, 1
        %s678 = scalar_lea.vmem [#allocation11], %s677
        // Predicated region
        $region65: #{tpu_custom_call.1} parent=43 // pred_check
          %p679 = pneg %p177
        $region66: #{tpu_custom_call.1} parent=43 // pred_check_branch
          %681 = sbr.rel (%p679) target = $region68
        $region67: #{tpu_custom_call.1} parent=43 // pred_region
          %s683 = ssub.s32 16, 16
          %684 = vsyncadd %s676, %s683
          %s685 = smul.addr %s28, 16
          %s686 = scalar_lea.hbm %s6, %s685
          %s688 = sshll.u32 %s678, 4
          %s689 = int_to_ptr.vmem [resolvable:$true] %s688
          %691 = dma.vmem_to_hbm [thread:$0]  %s689, 16, %s686, %s676
        $region68: #{tpu_custom_call.1} parent=43 // pred_fallthru
          _
        // Predicated region
        $region69: #{tpu_custom_call.1} parent=43 // pred_check
          %p692 = pneg %p198
        $region70: #{tpu_custom_call.1} parent=43 // pred_check_branch
          %694 = sbr.rel (%p692) target = $region72
        $region71: #{tpu_custom_call.1} parent=43 // pred_region
          %s696 = ssub.s32 32, 32
          %697 = vsyncadd [#allocation13], %s696
          %s699 = sshll.u32 [#allocation12], 4
          %s700 = int_to_ptr.vmem [resolvable:$true] %s699
          %702 = dma.vmem_to_hbm [thread:$0]  %s700, 32, %s7, [#allocation13]
        $region72: #{tpu_custom_call.1} parent=43 // pred_fallthru
          _
        // Predicated region
        $region73: #{tpu_custom_call.1} parent=43 // pred_check
          %p703 = pneg %p198
        $region74: #{tpu_custom_call.1} parent=43 // pred_check_branch
          %705 = sbr.rel (%p703) target = $region76
        $region75: #{tpu_custom_call.1} parent=43 // pred_region
          %706 = dma.done [#allocation13], 32
        $region76: #{tpu_custom_call.1} parent=43 // pred_fallthru
          _
      $region44: #{tpu_custom_call.1} parent=5 // pred_fallthru
        _
      %p707 = scmp.le.s32.totalorder 2, %s23
      // Predicated region
      $region77: #{tpu_custom_call.1} parent=5 // pred_check
        %p708 = pneg %p707
      $region78: #{tpu_custom_call.1} parent=5 // pred_check_branch
        %710 = sbr.rel (%p708) target = $region80
      $region79: #{tpu_custom_call.1} parent=5 // pred_region
        %s711 = ssub.s32 %s23, 2
        // Predicated region
        $region81: #{tpu_custom_call.1} parent=79 // pred_check
          %p712 = pneg %p183
        $region82: #{tpu_custom_call.1} parent=79 // pred_check_branch
          %714 = sbr.rel (%p712) target = $region84
        $region83: #{tpu_custom_call.1} parent=79 // pred_region
          %s715 = sand.u32 %s168, 1
          %s716 = scalar_lea.sflag [#allocation5], %s715
          %s717 = sand.u32 %s168, 1
          %s718 = scalar_lea.vmem [#allocation11], %s717
          %719 = dma.done %s716, 16
        $region84: #{tpu_custom_call.1} parent=79 // pred_fallthru
          _
      $region80: #{tpu_custom_call.1} parent=5 // pred_fallthru
        _
    $region6: #{tpu_custom_call.1} parent=1 // loop_footer
      %s27 = sadd.s32 1, %s23
    $region7: #{tpu_custom_call.1} parent=1 // loop_footer_branch
      %22 = sbr.rel target = $region3
    $region8: #{tpu_custom_call.1} parent=1 // loop_exit
      _
    %720 = vsyncpa [#allocation4], 1
    %s721 = scalar_lea.sflag [#allocation4], 1
    %722 = vsyncpa %s721, 1
    %723 = vsyncpa [#allocation7], 1
    %724 = vsyncpa [#allocation10], 1
    %s725 = scalar_lea.sflag [#allocation10], 1
    %726 = vsyncpa %s725, 1
    %727 = vsyncpa [#allocation5], 1
    %s728 = scalar_lea.sflag [#allocation5], 1
    %729 = vsyncpa %s728, 1
    %730 = vsyncpa [#allocation13], 1

</llo_original>
